<compile_context>
chip_gen: v5e
topology: v5e:2x2
jax: 0.10.0
libtpu: 0.0.40
codegen_flags: <defaults>
</compile_context>

<pallas_src>
import jax
import jax.numpy as jnp
from jax.experimental import pallas as pl
from jax.experimental.pallas import tpu as pltpu

IN_FEATURES = 9
HIDDEN = 4
LATENT = 2
_PROWS = 16   # packed-parameter buffer rows (padded to a multiple of 8)
_PCOLS = 4    # packed-parameter buffer cols


def encoder_kernel(x_ref, p_ref, z_ref):
    # x_ref: (TB, 9) native dtype;  p_ref: (16, 4) f32 packed params;  z_ref: (TB, 2) f32
    x = x_ref[...].astype(jnp.float32)
    p = p_ref[...]
    w1 = p[0:IN_FEATURES, 0:HIDDEN]                                        # (9, 4)
    b1 = p[IN_FEATURES:IN_FEATURES + 1, 0:HIDDEN]                          # (1, 4)
    w2 = p[IN_FEATURES + 1:IN_FEATURES + 1 + HIDDEN, 0:LATENT]             # (4, 2)
    b2 = p[IN_FEATURES + 1 + HIDDEN:IN_FEATURES + 2 + HIDDEN, 0:LATENT]    # (1, 2)

    h = jnp.maximum(jnp.dot(x, w1, preferred_element_type=jnp.float32) + b1, 0.0)
    z = jnp.maximum(jnp.dot(h, w2, preferred_element_type=jnp.float32) + b2, 0.0)
    z_ref[...] = z.astype(z_ref.dtype)


def pack_params(w1, b1, w2, b2):
    """Pack w1 (9,4), b1 (4,), w2 (4,2), b2 (2,) into a single (16, 4) f32 buffer.

    Weights are stored as (in_features, out_features), i.e. transposed from
    PyTorch's nn.Linear (out, in) layout, so the kernel computes x @ W + b.
    """
    p = jnp.zeros((_PROWS, _PCOLS), jnp.float32)
    p = p.at[0:IN_FEATURES, 0:HIDDEN].set(w1.astype(jnp.float32))
    p = p.at[IN_FEATURES, 0:HIDDEN].set(jnp.ravel(b1).astype(jnp.float32))
    p = p.at[IN_FEATURES + 1:IN_FEATURES + 1 + HIDDEN, 0:LATENT].set(
        w2.astype(jnp.float32))
    p = p.at[IN_FEATURES + 1 + HIDDEN, 0:LATENT].set(
        jnp.ravel(b2).astype(jnp.float32))
    return p


def encoder_forward(x, packed_params, *, tb_max=2048):
    """x: shape (B, ...) whose trailing dims flatten to 9 features (any float dtype)."""
    B = x.shape[0]
    x2d = x.reshape(B, -1)                     # torch.flatten(x, start_dim=1); keep native dtype
    assert x2d.shape[1] == IN_FEATURES, "Encoder expects 9 flattened input features"

    # Batch tile: full extent if small; otherwise a multiple-of-8 tile capped at tb_max
    # (second-to-last block dim must be divisible by 8 unless it equals the array dim).
    if B <= tb_max:
        tb = B
    else:
        tb = max(8, (tb_max // 8) * 8)
    grid = (pl.cdiv(B, tb),)

    # TODO(synk): output last-dim is 2 (lane-sparse masked stores); a transposed (2, B)
    # output slab would be lane-dense, but we keep (B, 2) to match the module's layout
    # and the write traffic is <1/4 of the x read traffic anyway (HBM-read-bound).

    flops = 2 * B * (IN_FEATURES * HIDDEN + HIDDEN * LATENT)
    bytes_accessed = (B * IN_FEATURES * x2d.dtype.itemsize
                      + B * LATENT * 4
                      + _PROWS * _PCOLS * 4)

    return pl.pallas_call(
        encoder_kernel,
        out_shape=jax.ShapeDtypeStruct((B, LATENT), jnp.float32),
        grid=grid,
        in_specs=[
            pl.BlockSpec((tb, IN_FEATURES), lambda i: (i, 0)),     # x tile, pipelined over batch
            pl.BlockSpec((_PROWS, _PCOLS), lambda i: (0, 0)),      # packed params, VMEM-resident
        ],
        out_specs=pl.BlockSpec((tb, LATENT), lambda i: (i, 0)),
        compiler_params=pltpu.CompilerParams(
            dimension_semantics=("parallel",),                     # megacore-shard batch on v7x
        ),
        cost_estimate=pl.CostEstimate(
            flops=flops, transcendentals=0, bytes_accessed=bytes_accessed),
    )(x2d, packed_params)


def init_params(key):
    """Deterministic init matching nn.Linear shapes (uniform like PyTorch default)."""
    k1, k2, k3, k4 = jax.random.split(key, 4)
    bound1 = 1.0 / jnp.sqrt(float(IN_FEATURES))
    w1 = jax.random.uniform(k1, (IN_FEATURES, HIDDEN), jnp.float32, -bound1, bound1)
    b1 = jax.random.uniform(k2, (HIDDEN,), jnp.float32, -bound1, bound1)
    bound2 = 1.0 / jnp.sqrt(float(HIDDEN))
    w2 = jax.random.uniform(k3, (HIDDEN, LATENT), jnp.float32, -bound2, bound2)
    b2 = jax.random.uniform(k4, (LATENT,), jnp.float32, -bound2, bound2)
    return w1, b1, w2, b2


def encoder_ref(x, w1, b1, w2, b2):
    """Pure-JAX reference for correctness check."""
    x2d = x.reshape(x.shape[0], -1).astype(jnp.float32)
    h = jnp.maximum(x2d @ w1 + b1[None, :], 0.0)
    return jnp.maximum(h @ w2 + b2[None, :], 0.0)


if __name__ == "__main__":
    key = jax.random.PRNGKey(0)
    kx, kp = jax.random.split(key)

    w1, b1, w2, b2 = init_params(kp)
    packed = pack_params(w1, b1, w2, b2)

    # Small input consistent with the module: (B, 1, 3, 3) flattens to 9 features.
    x = jax.random.normal(kx, (8, 1, 3, 3), dtype=jnp.float32)
    z = encoder_forward(x, packed)
    jax.block_until_ready(z)
    z_ref = encoder_ref(x, w1, b1, w2, b2)
    assert z.shape == (8, 2)
    assert jnp.allclose(z, z_ref, atol=1e-5, rtol=1e-5)

    # Exercise the tiled / pipelined path (multiple tiles + partial tail block)
    # with tiny data by forcing a small batch tile.
    x_big = jax.random.normal(jax.random.PRNGKey(1), (20, 1, 3, 3), dtype=jnp.float32)
    z_big = encoder_forward(x_big, packed, tb_max=8)
    jax.block_until_ready(z_big)
    z_big_ref = encoder_ref(x_big, w1, b1, w2, b2)
    assert z_big.shape == (20, 2)
    assert jnp.allclose(z_big, z_big_ref, atol=1e-5, rtol=1e-5)

    print("KERNEL_OK")
</pallas_src>

<mosaic_0001>
module attributes {stable_mosaic.version = 11 : i64} {
  func.func @encoder_kernel(%arg0: i32, %arg1: memref<8x9xf32, #tpu.memory_space<vmem>>, %arg2: memref<16x4xf32, #tpu.memory_space<vmem>>, %arg3: memref<8x2xf32, #tpu.memory_space<vmem>>) attributes {dimension_semantics = [#tpu.dimension_semantics<parallel>], iteration_bounds = array<i64: 1>, scalar_prefetch = 0 : i64, scratch_operands = 0 : i64, tpu.core_type = #tpu.core_type<tc>, window_params = [{transform_indices = @transform_0, window_bounds = array<i64: 8, 9>}, {pipeline_mode = #tpu.pipeline_mode<synchronous>, transform_indices = @transform_1, window_bounds = array<i64: 16, 4>}, {transform_indices = @transform_2, window_bounds = array<i64: 8, 2>}]} {
    %c0 = arith.constant 0 : index
    %c0_0 = arith.constant 0 : index
    %0 = vector.load %arg1[%c0, %c0_0] : memref<8x9xf32, #tpu.memory_space<vmem>>, vector<8x9xf32>
    %c0_1 = arith.constant 0 : index
    %c0_2 = arith.constant 0 : index
    %1 = vector.load %arg2[%c0_1, %c0_2] : memref<16x4xf32, #tpu.memory_space<vmem>>, vector<16x4xf32>
    %2 = vector.extract_strided_slice %1 {offsets = [0, 0], sizes = [9, 4], strides = [1, 1]} : vector<16x4xf32> to vector<9x4xf32>
    %3 = vector.extract_strided_slice %1 {offsets = [9, 0], sizes = [1, 4], strides = [1, 1]} : vector<16x4xf32> to vector<1x4xf32>
    %4 = vector.extract_strided_slice %1 {offsets = [10, 0], sizes = [4, 2], strides = [1, 1]} : vector<16x4xf32> to vector<4x2xf32>
    %5 = vector.extract_strided_slice %1 {offsets = [14, 0], sizes = [1, 2], strides = [1, 1]} : vector<16x4xf32> to vector<1x2xf32>
    %cst = arith.constant dense<0.000000e+00> : vector<8x4xf32>
    %6 = tpu.matmul %0, %2, %cst {dimension_numbers = #tpu.dot_dimension_numbers<[1], [0], [0], [1], [0, 0, 1, 1], [], []>} : vector<8x9xf32>, vector<9x4xf32>, vector<8x4xf32> -> vector<8x4xf32>
    %7 = vector.broadcast %3 : vector<1x4xf32> to vector<8x4xf32>
    %8 = arith.addf %6, %7 : vector<8x4xf32>
    %cst_3 = arith.constant 0.000000e+00 : f32
    %9 = vector.broadcast %cst_3 : f32 to vector<8x4xf32>
    %10 = arith.maximumf %8, %9 : vector<8x4xf32>
    %cst_4 = arith.constant dense<0.000000e+00> : vector<8x2xf32>
    %11 = tpu.matmul %10, %4, %cst_4 {dimension_numbers = #tpu.dot_dimension_numbers<[1], [0], [0], [1], [0, 0, 1, 1], [], []>} : vector<8x4xf32>, vector<4x2xf32>, vector<8x2xf32> -> vector<8x2xf32>
    %12 = vector.broadcast %5 : vector<1x2xf32> to vector<8x2xf32>
    %13 = arith.addf %11, %12 : vector<8x2xf32>
    %cst_5 = arith.constant 0.000000e+00 : f32
    %14 = vector.broadcast %cst_5 : f32 to vector<8x2xf32>
    %15 = arith.maximumf %13, %14 : vector<8x2xf32>
    %c0_6 = arith.constant 0 : index
    %c0_7 = arith.constant 0 : index
    %16 = vector.load %arg3[%c0_6, %c0_7] : memref<8x2xf32, #tpu.memory_space<vmem>>, vector<8x2xf32>
    tpu.vector_store %arg3[%c0_6, %c0_7], %15 {strides = array<i32>} : memref<8x2xf32, #tpu.memory_space<vmem>>, vector<8x2xf32>,
    return
  }
  func.func @transform_0(%arg0: i32) -> (i32, i32) {
    %c0_i32 = arith.constant 0 : i32
    %c0_i32_0 = arith.constant 0 : i32
    return %arg0, %c0_i32 : i32, i32
  }
  func.func @transform_1(%arg0: i32) -> (i32, i32) {
    %c0_i32 = arith.constant 0 : i32
    %c0_i32_0 = arith.constant 0 : i32
    %c0_i32_1 = arith.constant 0 : i32
    return %c0_i32, %c0_i32_0 : i32, i32
  }
  func.func @transform_2(%arg0: i32) -> (i32, i32) {
    %c0_i32 = arith.constant 0 : i32
    %c0_i32_0 = arith.constant 0 : i32
    return %arg0, %c0_i32 : i32, i32
  }
}

</mosaic_0001>

<llo_original>
// kernel: tpu_custom_call.1
$region0: #{tpu_custom_call.1}
  #allocation0 [shape = 'u32[]', space=smem, size = 0x4, offset = 0x4, fixed_abs, tag = 'smem constant byte address 0x4 - core index']
  #allocation1 [shape = 'u32[72,128]{1,0:T(1,128)}', space=vmem, size = 0x9000, scoped, tag = 'internal scratch']
  %s0 = inlined_call_operand.vmem [shape: f32[8,9], index: 0, kind: input, shape index: {}]
  %s1 = inlined_call_operand.vmem [shape: f32[16,4], index: 1, kind: input, shape index: {}]
  %s2 = inlined_call_operand.vmem [shape: f32[8,2], index: 2, kind: output, shape index: {}]
  %s3 = sld [smem:[#allocation0]]
  $region18: #{tpu_custom_call.1} parent=0
    _
  %s5 = ssub.s32 1, %s3
  %s6 = scalar_select 0, %s5, %s3
  // Predicated region
  $region2: #{tpu_custom_call.1} parent=0 // pred_check
    _
  $region3: #{tpu_custom_call.1} parent=0 // pred_check_branch
    %8 = sbr.rel (0) target = $region5
  $region4: #{tpu_custom_call.1} parent=0 // pred_region
    _
  $region5: #{tpu_custom_call.1} parent=0 // pred_fallthru
    _
  // Predicated region
  $region6: #{tpu_custom_call.1} parent=0 // pred_check
    _
  $region7: #{tpu_custom_call.1} parent=0 // pred_check_branch
    %10 = sbr.rel (0) target = $region9
  $region8: #{tpu_custom_call.1} parent=0 // pred_region
    _
  $region9: #{tpu_custom_call.1} parent=0 // pred_fallthru
    _
  %v11 = vld [vmem:[%s0] sm:$0xff]
  %v12 = vld [vmem:[%s1] sm:$0xff]
  %v13 = vld [vmem:[%s1 + $0x8] sm:$0xff]
  %v14 = vperm.slane %v13, 1
  %vm15 = vcmask 72704
  %v17 = vsel %vm15, %v11, 0
  %vm19 = vcmask 1040384
  %v21 = vsel %vm19, %v13, 0
  %23 = vmatpush.msra.mxu0 0.0
  %24 = vmatpush.msra.mxu0 0.0
  %25 = vmatpush.msra.mxu0 0.0
  %26 = vmatpush.msra.mxu0 0.0
  %27 = vmatpush.msra.mxu0 0.0
  %28 = vmatpush.msra.mxu0 0.0
  %29 = vmatpush.msra.mxu0 0.0
  %30 = vmatpush.msra.mxu0 0.0
  %31 = vmatpush.msra.mxu0 0.0
  %32 = vmatpush.msra.mxu0 0.0
  %33 = vmatpush.msra.mxu0 0.0
  %34 = vmatpush.msra.mxu0 0.0
  %35 = vmatpush.msra.mxu0 0.0
  %36 = vmatpush.msra.mxu0 0.0
  %37 = vmatpush.msra.mxu0 %v21
  %38 = vmatpush.msra.mxu0 %v12
  %39 = vmatmul.f32.gmra.mxu0 %v17
  %v40 = vpop.f32.mrf.mxu0
  %v41 = vadd.f32 %v14, %v40
  %42 = vdwg.mxu0
  %v43 = vmax.f32 %v41, 0.0
  %v44 = vperm.slane %v13, 6
  %v45 = vrot.slane %v13, 2
  %vm46 = vcmask 31744
  %v48 = vsel %vm46, %v43, 0
  %vm50 = vcmask 1043456
  %v51 = vsel %vm50, %v45, 0
  %53 = vmatpush.msra.mxu0 0.0
  %54 = vmatpush.msra.mxu0 0.0
  %55 = vmatpush.msra.mxu0 0.0
  %56 = vmatpush.msra.mxu0 0.0
  %57 = vmatpush.msra.mxu0 0.0
  %58 = vmatpush.msra.mxu0 0.0
  %59 = vmatpush.msra.mxu0 0.0
  %60 = vmatpush.msra.mxu0 0.0
  %61 = vmatpush.msra.mxu0 0.0
  %62 = vmatpush.msra.mxu0 0.0
  %63 = vmatpush.msra.mxu0 0.0
  %64 = vmatpush.msra.mxu0 0.0
  %65 = vmatpush.msra.mxu0 0.0
  %66 = vmatpush.msra.mxu0 0.0
  %67 = vmatpush.msra.mxu0 0.0
  %68 = vmatpush.msra.mxu0 %v51
  %69 = vmatmul.f32.gmra.mxu0 %v48
  %v70 = vpop.f32.mrf.mxu0
  %v71 = vadd.f32 %v44, %v70
  %72 = vdwg.mxu0
  %v73 = vmax.f32 %v71, 0.0
  %vm74 = vcmask 15360
  %75 = vst.msk [vmem:[%s2] sm:$0xff] %vm74, %v73
  // Predicated region
  $region10: #{tpu_custom_call.1} parent=0 // pred_check
    _
  $region11: #{tpu_custom_call.1} parent=0 // pred_check_branch
    %77 = sbr.rel (0) target = $region13
  $region12: #{tpu_custom_call.1} parent=0 // pred_region
    _
  $region13: #{tpu_custom_call.1} parent=0 // pred_fallthru
    _
  // Predicated region
  $region14: #{tpu_custom_call.1} parent=0 // pred_check
    _
  $region15: #{tpu_custom_call.1} parent=0 // pred_check_branch
    %79 = sbr.rel (0) target = $region17
  $region16: #{tpu_custom_call.1} parent=0 // pred_region
    _
  $region17: #{tpu_custom_call.1} parent=0 // pred_fallthru
    _

</llo_original>
